<compile_context>
chip_gen: v7x
topology: tpu7x:2x2x1
jax: 0.10.0
libtpu: 0.0.40
codegen_flags: <defaults>
</compile_context>

<pallas_src>
import jax
import jax.numpy as jnp
from jax.experimental import pallas as pl
from jax.experimental.pallas import tpu as pltpu


_LANES = 128
# 8192 rows x 128 lanes x 4 B = 4 MiB per buffer; with double-buffered input
# and output that's ~16 MiB, comfortably inside the default scoped VMEM on
# v5e (16/128 MiB after raise), v6e (32/128 MiB) and v7x (32/64 MiB).
_MAX_TILE_ROWS = 8192


# ----------------------------------------------------------------------------
# Pallas kernel: lane-dense identity copy of one (tile_rows, 128) block.
# ----------------------------------------------------------------------------
def _copy_kernel(x_ref, o_ref):
    o_ref[...] = x_ref[...]


def _pallas_identity(x):
    """Identity through a Pallas kernel over a lane-dense 2D slab."""
    orig_shape = x.shape
    orig_dtype = x.dtype
    total = x.size

    # Flatten to a lane-dense (rows, 128) slab so stores are full-width.
    flat = x.reshape(-1)
    rows = pl.cdiv(total, _LANES)

    if rows <= _MAX_TILE_ROWS:
        # Single block equal to the full array extents (satisfies the (8,128)
        # tiling rule even when rows is not a multiple of 8).
        tile_rows = rows
        padded_rows = rows
    else:
        tile_rows = _MAX_TILE_ROWS               # multiple of 8
        padded_rows = pl.cdiv(rows, tile_rows) * tile_rows

    padded_total = padded_rows * _LANES
    if padded_total != total:
        flat = jnp.pad(flat, (0, padded_total - total))
    slab = flat.reshape(padded_rows, _LANES)

    grid = (padded_rows // tile_rows,)
    itemsize = jnp.dtype(orig_dtype).itemsize

    out = pl.pallas_call(
        _copy_kernel,
        out_shape=jax.ShapeDtypeStruct((padded_rows, _LANES), orig_dtype),
        grid=grid,
        in_specs=[pl.BlockSpec((tile_rows, _LANES), lambda i: (i, 0))],
        out_specs=pl.BlockSpec((tile_rows, _LANES), lambda i: (i, 0)),
        # Output aliases the (freshly materialized) input slab: no second
        # HBM allocation, and the long "parallel" grid axis load-balances the
        # two v7x TensorCores.
        input_output_aliases={0: 0},
        cost_estimate=pl.CostEstimate(
            flops=0,
            transcendentals=0,
            bytes_accessed=2 * padded_total * itemsize,
        ),
        compiler_params=pltpu.CompilerParams(
            dimension_semantics=("parallel",),
        ),
    )(slab)

    return out.reshape(-1)[:total].reshape(orig_shape)


def transformer_only_att_forward(x, params=None, training=True):
    """Forward pass of Transformer_only_Att.

    Returns (x, attn_weights) where attn_weights is None — exactly as the
    PyTorch module does.  `params` is accepted (and ignored) to mirror the
    module's unused layer parameters.
    """
    out = _pallas_identity(x)
    attn_weights = None
    return out, attn_weights


# ----------------------------------------------------------------------------
# Deterministic parameter initialization (shapes from __init__; unused in
# forward, exactly like the PyTorch module).
# ----------------------------------------------------------------------------
def init_params(key, dim, depth, heads, dim_head, mlp_dim):
    inner_dim = dim_head * heads
    layers = []
    for _ in range(depth):
        key, k1, k2, k3, k4 = jax.random.split(key, 5)
        layers.append({
            # PreNorm(dim, Attention(...))
            "attn_ln_gamma": jnp.ones((dim,), jnp.float32),
            "attn_ln_beta": jnp.zeros((dim,), jnp.float32),
            "to_qkv_w": jax.random.normal(k1, (dim, inner_dim * 3), jnp.float32) * 0.02,
            "to_out_w": jax.random.normal(k2, (inner_dim, dim), jnp.float32) * 0.02,
            "to_out_b": jnp.zeros((dim,), jnp.float32),
            # PreNorm(dim, FeedForward(dim, mlp_dim))
            "ff_ln_gamma": jnp.ones((dim,), jnp.float32),
            "ff_ln_beta": jnp.zeros((dim,), jnp.float32),
            "ff_w1": jax.random.normal(k3, (dim, mlp_dim), jnp.float32) * 0.02,
            "ff_b1": jnp.zeros((mlp_dim,), jnp.float32),
            "ff_w2": jax.random.normal(k4, (mlp_dim, dim), jnp.float32) * 0.02,
            "ff_b2": jnp.zeros((dim,), jnp.float32),
        })
    return layers


if __name__ == "__main__":
    # Small shapes consistent with the module: batch=2, seq=8, dim=32.
    B, N, D = 2, 8, 32
    depth, heads, dim_head, mlp_dim = 2, 4, 8, 64

    key = jax.random.PRNGKey(0)
    kx, kp = jax.random.split(key)
    x = jax.random.normal(kx, (B, N, D), jnp.float32)

    params = init_params(kp, D, depth, heads, dim_head, mlp_dim)  # unused in forward

    out, attn_weights = transformer_only_att_forward(x, params, training=True)
    out = jax.block_until_ready(out)

    assert attn_weights is None
    assert out.shape == x.shape and out.dtype == x.dtype
    assert bool(jnp.allclose(out, x)), "identity forward mismatch"
    print("KERNEL_OK")
</pallas_src>

<mosaic_0001>
module attributes {stable_mosaic.version = 11 : i64} {
  func.func @_copy_kernel(%arg0: i32, %arg1: memref<4x128xf32, #tpu.memory_space<vmem>>, %arg2: memref<4x128xf32, #tpu.memory_space<vmem>>) attributes {dimension_semantics = [#tpu.dimension_semantics<parallel>], iteration_bounds = array<i64: 1>, scalar_prefetch = 0 : i64, scratch_operands = 0 : i64, tpu.core_type = #tpu.core_type<tc>, window_params = [{transform_indices = @transform_0, window_bounds = array<i64: 4, 128>}, {transform_indices = @transform_1, window_bounds = array<i64: 4, 128>}]} {
    %c0 = arith.constant 0 : index
    %c0_0 = arith.constant 0 : index
    %0 = vector.load %arg1[%c0, %c0_0] : memref<4x128xf32, #tpu.memory_space<vmem>>, vector<4x128xf32>
    %c0_1 = arith.constant 0 : index
    %c0_2 = arith.constant 0 : index
    %1 = vector.load %arg2[%c0_1, %c0_2] : memref<4x128xf32, #tpu.memory_space<vmem>>, vector<4x128xf32>
    tpu.vector_store %arg2[%c0_1, %c0_2], %0 {strides = array<i32>} : memref<4x128xf32, #tpu.memory_space<vmem>>, vector<4x128xf32>,
    return
  }
  func.func @transform_0(%arg0: i32) -> (i32, i32) {
    %c0_i32 = arith.constant 0 : i32
    %c0_i32_0 = arith.constant 0 : i32
    return %arg0, %c0_i32 : i32, i32
  }
  func.func @transform_1(%arg0: i32) -> (i32, i32) {
    %c0_i32 = arith.constant 0 : i32
    %c0_i32_0 = arith.constant 0 : i32
    return %arg0, %c0_i32 : i32, i32
  }
}

</mosaic_0001>

<llo_original>
// kernel: tpu_custom_call.1
$region0: #{tpu_custom_call.1}
  #allocation0 [shape = 'u32[]', space=smem, size = 0x4, offset = 0x4, fixed_abs, tag = 'smem constant byte address 0x4 - core index']
  #allocation1 [shape = 'u32[144,128]{1,0:T(1,128)}', space=vmem, size = 0x12000, scoped, tag = 'internal scratch']
  %s0 = inlined_call_operand.hbm [shape: f32[4,128], index: 0, kind: input, shape index: {}, may-alias: {0,1}]
  %s1 = inlined_call_operand.hbm [shape: f32[4,128], index: 1, kind: output, shape index: {}, may-alias: {0,1}]
  %s2 = sld [smem:[#allocation0]]
  $region18: #{tpu_custom_call.1} parent=0
    _
  %s4 = ssub.s32 1, %s2
  %s5 = scalar_select 0, %s4, %s2
  $region1: #{tpu_custom_call.1} parent=0
    #allocation2 [shape = 'u8[2048]{0}', space=vmem, size = 0x800, scoped, tag = 'input window, operand 0, single buffered']
    #allocation3 [shape = 's32[1]{0}', space=sflag, size = 0x4, scoped, tag = 'scoped memory for tpu_custom_call.1']
    #allocation4 [shape = 's32[1]{0}', space=sflag, size = 0x4, scoped, tag = 'scoped memory for tpu_custom_call.1']
    #allocation5 [shape = 'u8[2048]{0}', space=vmem, size = 0x800, scoped, tag = 'output window, operand 0, single buffered']
    %6 = vsyncpa [#allocation3], 0
    %7 = vsyncpa [#allocation4], 0
    // Predicated region
    $region2: #{tpu_custom_call.1} parent=1 // pred_check
      _
    $region3: #{tpu_custom_call.1} parent=1 // pred_check_branch
      %9 = sbr.rel (0) target = $region5
    $region4: #{tpu_custom_call.1} parent=1 // pred_region
      %s11 = ssub.s32 64, 64
      %12 = vsyncadd [#allocation3], %s11
      %s14 = sshll.u32 [#allocation2], 4
      %s15 = int_to_ptr.vmem [resolvable:$true] %s14
      %17 = dma.hbm_to_vmem [thread:$0]  %s0, 64, %s15, [#allocation3]
    $region5: #{tpu_custom_call.1} parent=1 // pred_fallthru
      _
    // Predicated region
    $region6: #{tpu_custom_call.1} parent=1 // pred_check
      _
    $region7: #{tpu_custom_call.1} parent=1 // pred_check_branch
      %19 = sbr.rel (0) target = $region9
    $region8: #{tpu_custom_call.1} parent=1 // pred_region
      %20 = dma.done [#allocation3], 64
    $region9: #{tpu_custom_call.1} parent=1 // pred_fallthru
      _
    %v21 = vld [vmem:[#allocation2] sm:$0xf]
    %22 = vst [vmem:[#allocation5] sm:$0xf] %v21
    // Predicated region
    $region10: #{tpu_custom_call.1} parent=1 // pred_check
      _
    $region11: #{tpu_custom_call.1} parent=1 // pred_check_branch
      %24 = sbr.rel (0) target = $region13
    $region12: #{tpu_custom_call.1} parent=1 // pred_region
      %s26 = ssub.s32 64, 64
      %27 = vsyncadd [#allocation4], %s26
      %s29 = sshll.u32 [#allocation5], 4
      %s30 = int_to_ptr.vmem [resolvable:$true] %s29
      %32 = dma.vmem_to_hbm [thread:$0]  %s30, 64, %s1, [#allocation4]
    $region13: #{tpu_custom_call.1} parent=1 // pred_fallthru
      _
    // Predicated region
    $region14: #{tpu_custom_call.1} parent=1 // pred_check
      _
    $region15: #{tpu_custom_call.1} parent=1 // pred_check_branch
      %34 = sbr.rel (0) target = $region17
    $region16: #{tpu_custom_call.1} parent=1 // pred_region
      %35 = dma.done [#allocation4], 64
    $region17: #{tpu_custom_call.1} parent=1 // pred_fallthru
      _
    %36 = vsyncpa [#allocation3], 1
    %37 = vsyncpa [#allocation4], 1

</llo_original>
